<compile_context>
chip_gen: v6e
topology: v6e:2x2x1
jax: 0.10.0
libtpu: 0.0.40
codegen_flags: <defaults>
</compile_context>

<pallas_src>
import numpy as np
import jax
import jax.numpy as jnp
from jax.experimental import pallas as pl
from jax.experimental.pallas import tpu as pltpu


# ----------------------- irreps plan (host-side, static) -----------------------
def _ir_dim(l):
    return 2 * l + 1


def _check_sorted(irreps):
    # Faithful mirror of ConcatIrrepsTensor.check_sorted (the PyTorch original
    # also never updates lmax/p after the first irrep).
    lmax, p = None, None
    for _mul, (l, pp) in irreps:
        if p is None and lmax is None:
            p, lmax = pp, l
            continue
        if l == lmax:
            assert p < pp, "Parity order error: {}".format(irreps)
        assert lmax <= l


def build_concat_plan(irreps_1, irreps_2):
    """Mirror ConcatIrrepsTensor.__init__ / forward: returns the static list of
    (source, src_start, size) column-copy ops in output order."""
    def dims(irreps):
        return [mul * _ir_dim(l) for mul, (l, _p) in irreps]

    def get_ir_index(ir, irreps):
        for idx, (_mul, irrep) in enumerate(irreps):
            if irrep == ir:
                return idx
        return -1

    lmax = max(max(l for _m, (l, _p) in irreps_1),
               max(l for _m, (l, _p) in irreps_2))
    irreps_max = []
    for i in range(lmax + 1):
        irreps_max.append((i, -1))   # odd parity first
        irreps_max.append((i, 1))    # then even

    d1_list, d2_list = dims(irreps_1), dims(irreps_2)
    plan = []
    s1 = s2 = 0
    for ir in irreps_max:
        i1, i2 = get_ir_index(ir, irreps_1), get_ir_index(ir, irreps_2)
        dim_1 = d1_list[i1] if i1 != -1 else None
        dim_2 = d2_list[i2] if i2 != -1 else None
        if dim_1 is not None:
            plan.append((0, s1, dim_1))
        if dim_2 is not None:
            plan.append((1, s2, dim_2))
        s1 = s1 + dim_1 if dim_1 is not None else s1
        s2 = s2 + dim_2 if dim_2 is not None else s2
    return plan


def coalesce_plan(plan):
    """Compile (src, src_start, size) list -> coalesced (src, src_start, out_start, size)
    copy ops, merging adjacent copies from the same source that are contiguous."""
    copies = []
    off = 0
    for src, start, size in plan:
        if copies and copies[-1][0] == src and copies[-1][1] + copies[-1][3] == start:
            s_, st_, o_, n_ = copies[-1]
            copies[-1] = (s_, st_, o_, n_ + size)
        else:
            copies.append((src, start, off, size))
        off += size
    return copies, off  # (copy ops, d_out)


# --------------------------------- Pallas kernel --------------------------------
def _make_concat_kernel(copy_plan):
    """Statically-unrolled column copies; exact for any dtype, no MXU traffic."""
    def kernel(f1_ref, f2_ref, o_ref):
        for src, s, o, n in copy_plan:          # static Python ints -> unrolled
            src_ref = f1_ref if src == 0 else f2_ref
            o_ref[:, o:o + n] = src_ref[:, s:s + n]
    return kernel


# --------------------------------- host wrapper ---------------------------------
def _round_up(x, m):
    return ((x + m - 1) // m) * m


def concat_irreps_forward(feature_1, feature_2, copy_plan, d_out, *, tile_rows=2048):
    assert feature_1.shape[:-1] == feature_2.shape[:-1], "leading dims must match"
    assert feature_1.dtype == feature_2.dtype, "feature dtypes must match"
    lead = feature_1.shape[:-1]
    rows = int(np.prod(lead)) if lead else 1
    d1, d2 = feature_1.shape[-1], feature_2.shape[-1]
    itemsize = np.dtype(feature_1.dtype).itemsize

    f1 = feature_1.reshape(rows, d1)
    f2 = feature_2.reshape(rows, d2)

    # --- row-tile selection ------------------------------------------------
    # Cap so double-buffered blocks fit a conservative VMEM budget (v7x: 64 MiB
    # physical / 32 MiB scoped default), and so the grid has >=2 steps where
    # possible (lets the "parallel" axis shard across both v7x TensorCores).
    vmem_budget = 16 << 20
    per_row_bytes = (d1 + d2 + d_out) * itemsize
    max_tile_vmem = max(8, (vmem_budget // (2 * per_row_bytes)) // 8 * 8)
    half_rows = _round_up(pl.cdiv(rows, 2), 8)
    tile = max(8, min(tile_rows, half_rows, max_tile_vmem))
    if tile >= rows:
        tile = rows  # single block; block dims equal full array dims

    grid = (pl.cdiv(rows, tile),)   # partial last block; no host-side padding

    cost = pl.CostEstimate(flops=0, transcendentals=0,
                           bytes_accessed=rows * per_row_bytes)
    vmem_limit = int(min(max(6 * tile * per_row_bytes, 4 << 20), 64 << 20))

    out = pl.pallas_call(
        _make_concat_kernel(copy_plan),
        out_shape=jax.ShapeDtypeStruct((rows, d_out), feature_1.dtype),
        grid=grid,
        in_specs=[
            pl.BlockSpec((tile, d1), lambda i: (i, 0)),
            pl.BlockSpec((tile, d2), lambda i: (i, 0)),
        ],
        out_specs=pl.BlockSpec((tile, d_out), lambda i: (i, 0)),
        compiler_params=pltpu.CompilerParams(
            dimension_semantics=("parallel",),
            vmem_limit_bytes=vmem_limit),
        cost_estimate=cost,
    )(f1, f2)

    return out.reshape(*lead, d_out)


# ------------------------------ pure-JAX reference -------------------------------
def reference_forward(feature_1, feature_2, plan):
    parts = []
    for src, start, size in plan:
        src_feat = feature_1 if src == 0 else feature_2
        parts.append(jax.lax.slice_in_dim(src_feat, start, start + size, axis=-1))
    return jnp.concatenate(parts, axis=-1)


# -------------------------------------- main -------------------------------------
if __name__ == "__main__":
    key = jax.random.PRNGKey(0)
    k1, k2 = jax.random.split(key)

    # irreps_1 = "8x0e + 4x1e + 2x2e"  -> channel dims 8, 12, 10  (D1 = 30)
    # irreps_2 = "4x0e + 2x1o + 2x1e"  -> channel dims 4,  6,  6  (D2 = 16)
    irreps_1 = [(8, (0, 1)), (4, (1, 1)), (2, (2, 1))]
    irreps_2 = [(4, (0, 1)), (2, (1, -1)), (2, (1, 1))]
    _check_sorted(irreps_1)
    _check_sorted(irreps_2)

    plan = build_concat_plan(irreps_1, irreps_2)
    copy_plan, d_out = coalesce_plan(plan)
    d1 = sum(m * _ir_dim(l) for m, (l, _p) in irreps_1)
    d2 = sum(m * _ir_dim(l) for m, (l, _p) in irreps_2)

    batch, nodes = 2, 16
    feature_1 = jax.random.normal(k1, (batch, nodes, d1), jnp.float32)
    feature_2 = jax.random.normal(k2, (batch, nodes, d2), jnp.float32)

    out = concat_irreps_forward(feature_1, feature_2, copy_plan, d_out)
    out = jax.block_until_ready(out)

    ref = reference_forward(feature_1, feature_2, plan)
    ref = jax.block_until_ready(ref)

    assert out.shape == (batch, nodes, d_out), out.shape
    assert np.array_equal(np.asarray(out), np.asarray(ref)), (
        "Pallas output does not match pure-JAX reference")

    # Also exercise a non-tile-multiple row count (partial last block path).
    k3, k4 = jax.random.split(k2)
    f1b = jax.random.normal(k3, (3, 7, d1), jnp.float32)   # rows=21, not /8
    f2b = jax.random.normal(k4, (3, 7, d2), jnp.float32)
    out_b = jax.block_until_ready(concat_irreps_forward(f1b, f2b, copy_plan, d_out))
    ref_b = jax.block_until_ready(reference_forward(f1b, f2b, plan))
    assert np.array_equal(np.asarray(out_b), np.asarray(ref_b)), (
        "Pallas output (partial-block case) does not match reference")

    print("KERNEL_OK")
</pallas_src>

<mosaic_0001>
module attributes {stable_mosaic.version = 11 : i64} {
  func.func @kernel(%arg0: i32, %arg1: memref<16x30xf32, #tpu.memory_space<vmem>>, %arg2: memref<16x16xf32, #tpu.memory_space<vmem>>, %arg3: memref<16x46xf32, #tpu.memory_space<vmem>>) attributes {dimension_semantics = [#tpu.dimension_semantics<parallel>], iteration_bounds = array<i64: 2>, scalar_prefetch = 0 : i64, scratch_operands = 0 : i64, tpu.core_type = #tpu.core_type<tc>, window_params = [{transform_indices = @transform_0, window_bounds = array<i64: 16, 30>}, {transform_indices = @transform_1, window_bounds = array<i64: 16, 16>}, {transform_indices = @transform_2, window_bounds = array<i64: 16, 46>}]} {
    %c0 = arith.constant 0 : index
    %c0_0 = arith.constant 0 : index
    %0 = vector.load %arg1[%c0, %c0_0] : memref<16x30xf32, #tpu.memory_space<vmem>>, vector<16x8xf32>
    %c0_1 = arith.constant 0 : index
    %c0_2 = arith.constant 0 : index
    %1 = vector.load %arg3[%c0_1, %c0_2] : memref<16x46xf32, #tpu.memory_space<vmem>>, vector<16x8xf32>
    tpu.vector_store %arg3[%c0_1, %c0_2], %0 {strides = array<i32>} : memref<16x46xf32, #tpu.memory_space<vmem>>, vector<16x8xf32>,
    %c0_3 = arith.constant 0 : index
    %c0_4 = arith.constant 0 : index
    %2 = vector.load %arg2[%c0_3, %c0_4] : memref<16x16xf32, #tpu.memory_space<vmem>>, vector<16x10xf32>
    %c0_5 = arith.constant 0 : index
    %c8 = arith.constant 8 : index
    %3 = vector.load %arg3[%c0_5, %c8] : memref<16x46xf32, #tpu.memory_space<vmem>>, vector<16x10xf32>
    tpu.vector_store %arg3[%c0_5, %c8], %2 {strides = array<i32>} : memref<16x46xf32, #tpu.memory_space<vmem>>, vector<16x10xf32>,
    %c0_6 = arith.constant 0 : index
    %c8_7 = arith.constant 8 : index
    %4 = vector.load %arg1[%c0_6, %c8_7] : memref<16x30xf32, #tpu.memory_space<vmem>>, vector<16x12xf32>
    %c0_8 = arith.constant 0 : index
    %c18 = arith.constant 18 : index
    %5 = vector.load %arg3[%c0_8, %c18] : memref<16x46xf32, #tpu.memory_space<vmem>>, vector<16x12xf32>
    tpu.vector_store %arg3[%c0_8, %c18], %4 {strides = array<i32>} : memref<16x46xf32, #tpu.memory_space<vmem>>, vector<16x12xf32>,
    %c0_9 = arith.constant 0 : index
    %c10 = arith.constant 10 : index
    %6 = vector.load %arg2[%c0_9, %c10] : memref<16x16xf32, #tpu.memory_space<vmem>>, vector<16x6xf32>
    %c0_10 = arith.constant 0 : index
    %c30 = arith.constant 30 : index
    %7 = vector.load %arg3[%c0_10, %c30] : memref<16x46xf32, #tpu.memory_space<vmem>>, vector<16x6xf32>
    tpu.vector_store %arg3[%c0_10, %c30], %6 {strides = array<i32>} : memref<16x46xf32, #tpu.memory_space<vmem>>, vector<16x6xf32>,
    %c0_11 = arith.constant 0 : index
    %c20 = arith.constant 20 : index
    %8 = vector.load %arg1[%c0_11, %c20] : memref<16x30xf32, #tpu.memory_space<vmem>>, vector<16x10xf32>
    %c0_12 = arith.constant 0 : index
    %c36 = arith.constant 36 : index
    %9 = vector.load %arg3[%c0_12, %c36] : memref<16x46xf32, #tpu.memory_space<vmem>>, vector<16x10xf32>
    tpu.vector_store %arg3[%c0_12, %c36], %8 {strides = array<i32>} : memref<16x46xf32, #tpu.memory_space<vmem>>, vector<16x10xf32>,
    return
  }
  func.func @transform_0(%arg0: i32) -> (i32, i32) {
    %c0_i32 = arith.constant 0 : i32
    %c0_i32_0 = arith.constant 0 : i32
    return %arg0, %c0_i32 : i32, i32
  }
  func.func @transform_1(%arg0: i32) -> (i32, i32) {
    %c0_i32 = arith.constant 0 : i32
    %c0_i32_0 = arith.constant 0 : i32
    return %arg0, %c0_i32 : i32, i32
  }
  func.func @transform_2(%arg0: i32) -> (i32, i32) {
    %c0_i32 = arith.constant 0 : i32
    %c0_i32_0 = arith.constant 0 : i32
    return %arg0, %c0_i32 : i32, i32
  }
}

</mosaic_0001>

<llo_original>
// kernel: tpu_custom_call.1
$region0: #{tpu_custom_call.1}
  #allocation0 [shape = 'u32[]', space=smem, size = 0x4, offset = 0x4, fixed_abs, tag = 'smem constant byte address 0x4 - core index']
  #allocation1 [shape = 'u32[144,128]{1,0:T(1,128)}', space=vmem, size = 0x12000, scoped, tag = 'internal scratch']
  %s0 = inlined_call_operand.vmem [shape: f32[32,30], index: 0, kind: input, shape index: {}]
  %s1 = inlined_call_operand.vmem [shape: f32[32,16], index: 1, kind: input, shape index: {}]
  %s2 = inlined_call_operand.hbm [shape: f32[32,46], index: 2, kind: output, shape index: {}]
  %s3 = sld [smem:[#allocation0]]
  $region41: #{tpu_custom_call.1} parent=0
    _
  %s5 = ssub.s32 1, %s3
  %s6 = scalar_select 0, %s5, %s3
  $region1: #{tpu_custom_call.1} parent=0
    #allocation2 [shape = 'u8[16384]{0}', space=vmem, size = 0x4000, scoped, tag = 'output window, operand 0']
    #allocation3 [shape = 's32[2]{0}', space=sflag, size = 0x8, scoped, tag = 'scoped memory for tpu_custom_call.1']
    %7 = vsyncpa [#allocation3], 0
    %s8 = scalar_lea.sflag [#allocation3], 1
    %9 = vsyncpa %s8, 0
    loop: start=0, step=1, limit=4
    $region2: #{tpu_custom_call.1} parent=1 // loop_pre_header
      _
    $region3: #{tpu_custom_call.1} parent=1 // loop_header
      %s11 = sphi 0, %s15
      %p12 = scmp.ge.s32.totalorder %s11, 4
      %s21 = sphi 0, %s23
      %s24 = sphi 0, %s21
      %s25 = sphi 0, %s24
      %s41 = sphi 0, %s25
      %s47 = sphi 0, %s49
      %s50 = sphi 0, %s47
      %s51 = sphi 0, %s50
      %s67 = sphi 0, %s51
      %s73 = sphi 0, %s75
      %s76 = sphi 0, %s73
      %s77 = sphi 0, %s76
      %s93 = sphi 0, %s77
    $region4: #{tpu_custom_call.1} parent=1 // loop_header_branch
      %14 = sbr.rel (%p12) target = $region8
    $region5: #{tpu_custom_call.1} parent=1 // loop_body
      %s16 = ssub.s32 %s11, 1
      %s17 = ssub.s32 %s11, 2
      %s18 = sadd.s32 %s11, 1
      %s19 = ssub.s32 %s11, %s18
      %p20 = scmp.eq.s32.totalorder %s19, 0
      %s22 = sadd.s32 %s21, 1
      %s23 = scalar_select %p20, %s21, %s22
      %p26 = pneg %p20
      %p27 = scmp.eq.s32.totalorder %s11, 1
      %p28 = por %p26, %p27
      %p29 = scmp.ne.s32.totalorder %s21, %s24
      %p30 = scmp.eq.s32.totalorder %s11, 0
      %p31 = por %p29, %p30
      %p32 = scmp.ne.s32.totalorder %s21, %s24
      %p33 = scmp.eq.s32.totalorder %s16, 1
      %p34 = por %p32, %p33
      %p35 = scmp.ne.s32.totalorder %s24, %s25
      %p36 = scmp.eq.s32.totalorder %s16, 0
      %p37 = por %p35, %p36
      %p38 = scmp.ne.s32.totalorder %s24, %s25
      %p39 = scmp.eq.s32.totalorder %s17, 1
      %p40 = por %p38, %p39
      %p42 = scmp.ne.s32.totalorder %s25, %s41
      %p43 = scmp.eq.s32.totalorder %s17, 0
      %p44 = por %p42, %p43
      %s45 = ssub.s32 %s11, %s18
      %p46 = scmp.eq.s32.totalorder %s45, 0
      %s48 = sadd.s32 %s47, 1
      %s49 = scalar_select %p46, %s47, %s48
      %p52 = pneg %p46
      %p53 = scmp.eq.s32.totalorder %s11, 1
      %p54 = por %p52, %p53
      %p55 = scmp.ne.s32.totalorder %s47, %s50
      %p56 = scmp.eq.s32.totalorder %s11, 0
      %p57 = por %p55, %p56
      %p58 = scmp.ne.s32.totalorder %s47, %s50
      %p59 = scmp.eq.s32.totalorder %s16, 1
      %p60 = por %p58, %p59
      %p61 = scmp.ne.s32.totalorder %s50, %s51
      %p62 = scmp.eq.s32.totalorder %s16, 0
      %p63 = por %p61, %p62
      %p64 = scmp.ne.s32.totalorder %s50, %s51
      %p65 = scmp.eq.s32.totalorder %s17, 1
      %p66 = por %p64, %p65
      %p68 = scmp.ne.s32.totalorder %s51, %s67
      %p69 = scmp.eq.s32.totalorder %s17, 0
      %p70 = por %p68, %p69
      %s71 = ssub.s32 %s11, %s18
      %p72 = scmp.eq.s32.totalorder %s71, 0
      %s74 = sadd.s32 %s73, 1
      %s75 = scalar_select %p72, %s73, %s74
      %p78 = pneg %p72
      %p79 = scmp.eq.s32.totalorder %s11, 1
      %p80 = por %p78, %p79
      %p81 = scmp.ne.s32.totalorder %s73, %s76
      %p82 = scmp.eq.s32.totalorder %s11, 0
      %p83 = por %p81, %p82
      %p84 = scmp.ne.s32.totalorder %s73, %s76
      %p85 = scmp.eq.s32.totalorder %s16, 1
      %p86 = por %p84, %p85
      %p87 = scmp.ne.s32.totalorder %s76, %s77
      %p88 = scmp.eq.s32.totalorder %s16, 0
      %p89 = por %p87, %p88
      %p90 = scmp.ne.s32.totalorder %s76, %s77
      %p91 = scmp.eq.s32.totalorder %s17, 1
      %p92 = por %p90, %p91
      %p94 = scmp.ne.s32.totalorder %s77, %s93
      %p95 = scmp.eq.s32.totalorder %s17, 0
      %p96 = por %p94, %p95
      %p97 = scmp.le.s32.totalorder 1, %s11
      %p98 = scmp.lt.s32.totalorder %s11, 3
      %p99 = pnand %p97, %p98
      %p100 = pneg %p99
      // Predicated region
      $region9: #{tpu_custom_call.1} parent=5 // pred_check
        _
      $region10: #{tpu_custom_call.1} parent=5 // pred_check_branch
        %102 = sbr.rel (%p99) target = $region12
      $region11: #{tpu_custom_call.1} parent=5 // pred_region
        %s103 = ssub.s32 %s11, 1
      $region12: #{tpu_custom_call.1} parent=5 // pred_fallthru
        _
      %p104 = scmp.lt.s32.totalorder %s11, 2
      // Predicated region
      $region13: #{tpu_custom_call.1} parent=5 // pred_check
        %p105 = pneg %p104
      $region14: #{tpu_custom_call.1} parent=5 // pred_check_branch
        %107 = sbr.rel (%p105) target = $region16
      $region15: #{tpu_custom_call.1} parent=5 // pred_region
        // Predicated region
        $region17: #{tpu_custom_call.1} parent=15 // pred_check
          %p108 = pneg %p31
        $region18: #{tpu_custom_call.1} parent=15 // pred_check_branch
          %110 = sbr.rel (%p108) target = $region20
        $region19: #{tpu_custom_call.1} parent=15 // pred_region
          %s111 = smul.u32 2, %s11
          %p112 = scmp.lt.s32.totalorder %s111, 3
          %s113 = scalar_select %p112, %s111, 3
          %s114 = smul.addr %s113, 8
          %s115 = scalar_lea.vmem %s0, %s114
          %s116 = smul.u32 2, %s11
        $region20: #{tpu_custom_call.1} parent=15 // pred_fallthru
          _
        // Predicated region
        $region21: #{tpu_custom_call.1} parent=15 // pred_check
          %p117 = pneg %p57
        $region22: #{tpu_custom_call.1} parent=15 // pred_check_branch
          %119 = sbr.rel (%p117) target = $region24
        $region23: #{tpu_custom_call.1} parent=15 // pred_region
          %s120 = smul.u32 2, %s11
          %p121 = scmp.lt.s32.totalorder %s120, 3
          %s122 = scalar_select %p121, %s120, 3
          %s123 = smul.addr %s122, 8
          %s124 = scalar_lea.vmem %s1, %s123
          %s125 = smul.u32 2, %s11
        $region24: #{tpu_custom_call.1} parent=15 // pred_fallthru
          _
      $region16: #{tpu_custom_call.1} parent=5 // pred_fallthru
        _
      %p126 = scmp.le.s32.totalorder 1, %s11
      %p127 = scmp.lt.s32.totalorder %s11, 3
      %p128 = pnand %p126, %p127
      %p129 = pneg %p128
      // Predicated region
      $region25: #{tpu_custom_call.1} parent=5 // pred_check
        _
      $region26: #{tpu_custom_call.1} parent=5 // pred_check_branch
        %131 = sbr.rel (%p128) target = $region28
      $region27: #{tpu_custom_call.1} parent=5 // pred_region
        %s132 = ssub.s32 %s11, 1
        %s133 = smul.u32 2, %s16
        %p134 = scmp.lt.s32.totalorder %s133, 3
        %s135 = scalar_select %p134, %s133, 3
        %s136 = smul.addr %s135, 8
        %s137 = scalar_lea.vmem %s0, %s136
        %p138 = pneg %p37
        %p139 = pneg %p34
        %s140 = smul.u32 2, %s16
        %p141 = scmp.lt.s32.totalorder %s140, 3
        %s142 = scalar_select %p141, %s140, 3
        %s143 = smul.addr %s142, 8
        %s144 = scalar_lea.vmem %s1, %s143
        %p145 = pneg %p63
        %p146 = pneg %p60
        %p147 = pneg %p89
        %p148 = pneg %p86
        %s149 = sand.u32 %s76, 1
        %s150 = scalar_lea.sflag [#allocation3], %s149
        %s151 = sand.u32 %s76, 1
        %s152 = smul.addr %s151, 16
        %s153 = scalar_lea.vmem [#allocation2], %s152
        %s154 = smul.u32 2, %s16
        %p155 = scmp.lt.s32.totalorder %s154, 3
        %s156 = scalar_select %p155, %s154, 3
        %s157 = smul.addr %s156, 8
        %s158 = scalar_lea.vmem %s0, %s157
        %s159 = smul.u32 2, %s16
        %s160 = smul.u32 2, %s16
        %p161 = scmp.lt.s32.totalorder %s160, 3
        %s162 = scalar_select %p161, %s160, 3
        %s163 = smul.addr %s162, 8
        %s164 = scalar_lea.vmem %s1, %s163
        %s165 = smul.u32 2, %s16
        %s166 = smul.u32 2, %s16
        %v167 = vld [vmem:[%s158] sm:$0xff]
        %v168 = vld [vmem:[%s158 + $0x8] sm:$0xff]
        %vm169 = vcmask 64512
        %170 = vst.msk [vmem:[%s153] sm:$0xff] %vm169, %v167
        %171 = vst.msk [vmem:[%s153 + $0x8] sm:$0xff] %vm169, %v168
        %v172 = vld [vmem:[%s164] sm:$0xff]
        %v173 = vld [vmem:[%s164 + $0x8] sm:$0xff]
        %176 = vrot.lane.b32.xlu0 %v172, 8
        %v177 = vpop.permute.xlu0 %176
        %178 = vrot.lane.b32.xlu0 %v173, 8
        %v179 = vpop.permute.xlu0 %178
        %vm182 = vcmask 146496
        %183 = vst.msk [vmem:[%s153] sm:$0xff] %vm182, %v177
        %184 = vst.msk [vmem:[%s153 + $0x8] sm:$0xff] %vm182, %v179
        %v185 = vld [vmem:[%s158] sm:$0xff]
        %v186 = vld [vmem:[%s158 + $0x8] sm:$0xff]
        %189 = vrot.lane.b32.xlu0 %v185, 10
        %v190 = vpop.permute.xlu0 %189
        %191 = vrot.lane.b32.xlu0 %v186, 10
        %v192 = vpop.permute.xlu0 %191
        %vm195 = vcmask 244880
        %196 = vst.msk [vmem:[%s153] sm:$0xff] %vm195, %v190
        %197 = vst.msk [vmem:[%s153 + $0x8] sm:$0xff] %vm195, %v192
        %v198 = vld [vmem:[%s164] sm:$0xff]
        %v199 = vld [vmem:[%s164 + $0x8] sm:$0xff]
        %202 = vrot.lane.b32.xlu0 %v198, 20
        %v203 = vpop.permute.xlu0 %202
        %204 = vrot.lane.b32.xlu0 %v199, 20
        %v205 = vpop.permute.xlu0 %204
        %vm208 = vcmask 294128
        %209 = vst.msk [vmem:[%s153] sm:$0xff] %vm208, %v203
        %210 = vst.msk [vmem:[%s153 + $0x8] sm:$0xff] %vm208, %v205
        %v211 = vld [vmem:[%s158] sm:$0xff]
        %v212 = vld [vmem:[%s158 + $0x8] sm:$0xff]
        %215 = vrot.lane.b32.xlu0 %v211, 16
        %v216 = vpop.permute.xlu0 %215
        %217 = vrot.lane.b32.xlu0 %v212, 16
        %v218 = vpop.permute.xlu0 %217
        %vm221 = vcmask 376096
        %222 = vst.msk [vmem:[%s153] sm:$0xff] %vm221, %v216
        %223 = vst.msk [vmem:[%s153 + $0x8] sm:$0xff] %vm221, %v218
        %s224 = sand.u32 %s76, 1
        %s225 = scalar_lea.sflag [#allocation3], %s224
        %s226 = sand.u32 %s76, 1
        %s227 = smul.addr %s226, 16
        %s228 = scalar_lea.vmem [#allocation2], %s227
        // Predicated region
        $region29: #{tpu_custom_call.1} parent=27 // pred_check
          %p229 = pneg %p86
        $region30: #{tpu_custom_call.1} parent=27 // pred_check_branch
          %231 = sbr.rel (%p229) target = $region32
        $region31: #{tpu_custom_call.1} parent=27 // pred_region
          %s232 = smul.u32 2, %s16
          %s234 = ssub.s32 256, 256
          %235 = vsyncadd %s225, %s234
          %s236 = smul.addr %s232, 128
          %s237 = scalar_lea.hbm %s2, %s236
          %s238 = sshll.u32 %s228, 4
          %s239 = int_to_ptr.vmem [resolvable:$true] %s238
          %244 = dma.vmem_to_hbm [thread:$0]  %s239, 256, %s237, %s225, 128, 128, 8
        $region32: #{tpu_custom_call.1} parent=27 // pred_fallthru
          _
      $region28: #{tpu_custom_call.1} parent=5 // pred_fallthru
        _
      %p245 = scmp.le.s32.totalorder 2, %s11
      // Predicated region
      $region33: #{tpu_custom_call.1} parent=5 // pred_check
        %p246 = pneg %p245
      $region34: #{tpu_custom_call.1} parent=5 // pred_check_branch
        %248 = sbr.rel (%p246) target = $region36
      $region35: #{tpu_custom_call.1} parent=5 // pred_region
        %s249 = ssub.s32 %s11, 2
        // Predicated region
        $region37: #{tpu_custom_call.1} parent=35 // pred_check
          %p250 = pneg %p92
        $region38: #{tpu_custom_call.1} parent=35 // pred_check_branch
          %252 = sbr.rel (%p250) target = $region40
        $region39: #{tpu_custom_call.1} parent=35 // pred_region
          %s253 = sand.u32 %s77, 1
          %s254 = scalar_lea.sflag [#allocation3], %s253
          %s255 = sand.u32 %s77, 1
          %s256 = smul.addr %s255, 16
          %s257 = scalar_lea.vmem [#allocation2], %s256
          %258 = dma.done %s254, 256
        $region40: #{tpu_custom_call.1} parent=35 // pred_fallthru
          _
      $region36: #{tpu_custom_call.1} parent=5 // pred_fallthru
        _
    $region6: #{tpu_custom_call.1} parent=1 // loop_footer
      %s15 = sadd.s32 1, %s11
    $region7: #{tpu_custom_call.1} parent=1 // loop_footer_branch
      %10 = sbr.rel target = $region3
    $region8: #{tpu_custom_call.1} parent=1 // loop_exit
      _
    %259 = vsyncpa [#allocation3], 1
    %s260 = scalar_lea.sflag [#allocation3], 1
    %261 = vsyncpa %s260, 1

</llo_original>
